<compile_context>
chip_gen: v7x
topology: tpu7x:2x2x1
jax: 0.10.0
libtpu: 0.0.40
codegen_flags: <defaults>
</compile_context>

<pallas_src>
import functools

import jax
import jax.numpy as jnp
from jax.experimental import pallas as pl
from jax.experimental.pallas import tpu as pltpu


def gate_unit_kernel(m_ref, f_ref, h_ref, w_big_ref, b_big_ref, wt_h_ref,
                     out_ref, *, hidden_size, inv_div):
    H = hidden_size
    m = m_ref[...]                       # (tB, H)   message
    f = f_ref[...] * inv_div             # (tB, F)   factor / div (exact in f32)
    h = h_ref[...]                       # (tB, H)   hidden_state

    # Single packed MXU pass: X (tB, 2H+F) @ W_big (2H+F, 3H).
    x = jnp.concatenate([m, f, h], axis=1)
    pre = jnp.dot(x, w_big_ref[...],
                  preferred_element_type=jnp.float32) + b_big_ref[...]

    # Fused sigmoid over the update|reset slab, slice only afterwards.
    gates = jax.nn.sigmoid(pre[:, :2 * H])
    update = gates[:, :H]
    reset = gates[:, H:]

    # Candidate: message contribution already sits in pre[:, 2H:]; add the
    # reset*hidden contribution with the only remaining matmul.
    cand = jnp.tanh(pre[:, 2 * H:]
                    + jnp.dot(reset * h, wt_h_ref[...],
                              preferred_element_type=jnp.float32))

    out_ref[...] = ((1.0 - update) * h + update * cand).astype(out_ref.dtype)


def pack_gate_unit_params(params, hidden_size, factor_size):
    """One-time weight packing (call once, outside the per-forward path).

    PyTorch nn.Linear weights are [out, in]; we transpose to [in, out] and pack:
      W_big (2H+F, 3H): columns [update | reset | cand_message], with the
        cand_message columns zero in the factor/hidden input rows.
      b_big (1, 3H):    [gate_b (update|reset) | trans_b]
      Wt_h  (H, H):     trans weight rows acting on reset*hidden.
    """
    H, F = hidden_size, factor_size
    gw = params["gate_w"].T                       # (2H + F, 2H)  rows: [m | f | h]
    tw = params["trans_w"].T                      # (2H, H)       rows: [m | r*h]
    wt_m, wt_h = tw[:H], tw[H:]
    cand_cols = jnp.concatenate(
        [wt_m, jnp.zeros((H + F, H), dtype=gw.dtype)], axis=0)     # (2H+F, H)
    w_big = jnp.concatenate([gw, cand_cols], axis=1)               # (2H+F, 3H)
    b_big = jnp.concatenate(
        [params["gate_b"], params["trans_b"]]).reshape(1, -1)      # (1, 3H)
    return {"w_big": w_big, "b_big": b_big, "wt_h": wt_h}


def gate_unit_expand(packed, message, factor, hidden_state, *, div=4, tile_b=2048):
    """Pallas implementation of GateUnitExpand.forward (packed params)."""
    B, H = hidden_state.shape
    F = factor.shape[1]
    w_big, b_big, wt_h = packed["w_big"], packed["b_big"], packed["wt_h"]

    # Batch tile: big (amortise per-step overhead + weight re-stream), multiple
    # of 8, but capped at an 8-aligned cdiv(B, 2) so the "parallel" grid axis
    # has >=2 tiles whenever B allows it (v7x megacore).
    half = ((pl.cdiv(B, 2) + 7) // 8) * 8
    tile_b = max(8, min(tile_b, half))
    grid = (pl.cdiv(B, tile_b),)   # ragged last tile is fine: op is row-wise

    kernel = functools.partial(gate_unit_kernel,
                               hidden_size=H, inv_div=1.0 / float(div))

    batch_spec = lambda feat: pl.BlockSpec((tile_b, feat), lambda i: (i, 0))
    full_spec = lambda shape: pl.BlockSpec(shape, lambda i: (0, 0))

    return pl.pallas_call(
        kernel,
        out_shape=jax.ShapeDtypeStruct((B, H), jnp.float32),
        grid_spec=pltpu.PrefetchScalarGridSpec(
            num_scalar_prefetch=0,
            grid=grid,
            in_specs=[
                batch_spec(H),              # message
                batch_spec(F),              # factor
                batch_spec(H),              # hidden_state
                full_spec(w_big.shape),     # W_big (2H+F, 3H)
                full_spec(b_big.shape),     # b_big (1, 3H)
                full_spec(wt_h.shape),      # Wt_h  (H, H)
            ],
            out_specs=pl.BlockSpec((tile_b, H), lambda i: (i, 0)),
        ),
        compiler_params=pltpu.CompilerParams(
            dimension_semantics=("parallel",)),
    )(message, factor, hidden_state, w_big, b_big, wt_h)


def reference_forward(params, message, factor, hidden_state, *, div=4):
    """Pure-JAX reference mirroring the PyTorch GateUnitExpand.forward."""
    H = hidden_state.shape[1]
    factors = jnp.concatenate([message, factor / div, hidden_state], axis=1)
    g = jax.nn.sigmoid(factors @ params["gate_w"].T + params["gate_b"])
    update, reset = g[:, :H], g[:, H:]
    cand = jnp.tanh(
        jnp.concatenate([message, reset * hidden_state], axis=1)
        @ params["trans_w"].T + params["trans_b"])
    return (1.0 - update) * hidden_state + update * cand


def make_params(key, hidden_size, factor_size):
    H, F = hidden_size, factor_size
    k1, k2, k3, k4 = jax.random.split(key, 4)
    s = lambda k, shape, scale: (scale * jax.random.normal(k, shape)).astype(jnp.float32)
    return {
        # PyTorch nn.Linear layout: weight [out, in], bias [out].
        "gate_w": s(k1, (2 * H, 2 * H + F), 0.2),   # Linear(2H + F, 2H)
        "gate_b": s(k2, (2 * H,), 0.1),
        "trans_w": s(k3, (H, 2 * H), 0.2),          # Linear(2H, H)
        "trans_b": s(k4, (H,), 0.1),
    }


if __name__ == "__main__":
    hidden_size, factor_size, div = 32, 48, 4
    batch = 100   # small, not tile-aligned: exercises >=2 tiles + ragged last tile

    key = jax.random.PRNGKey(0)
    k_p, k_m, k_f, k_h = jax.random.split(key, 4)

    params = make_params(k_p, hidden_size, factor_size)
    message = jax.random.normal(k_m, (batch, hidden_size), jnp.float32)
    factor = jax.random.normal(k_f, (batch, factor_size), jnp.float32)
    hidden_state = jax.random.normal(k_h, (batch, hidden_size), jnp.float32)

    # Weight packing happens ONCE, outside the per-forward path.
    packed = pack_gate_unit_params(params, hidden_size, factor_size)

    out = gate_unit_expand(packed, message, factor, hidden_state, div=div)
    out = jax.block_until_ready(out)

    ref = jax.block_until_ready(
        reference_forward(params, message, factor, hidden_state, div=div))

    assert out.shape == (batch, hidden_size)
    max_err = float(jnp.max(jnp.abs(out - ref)))
    assert jnp.allclose(out, ref, atol=2e-4, rtol=2e-4), max_err

    print("KERNEL_OK")
</pallas_src>

<mosaic_0001>
module attributes {stable_mosaic.version = 11 : i64} {
  func.func @gate_unit_kernel(%arg0: i32, %arg1: memref<56x32xf32, #tpu.memory_space<vmem>>, %arg2: memref<56x48xf32, #tpu.memory_space<vmem>>, %arg3: memref<56x32xf32, #tpu.memory_space<vmem>>, %arg4: memref<112x96xf32, #tpu.memory_space<vmem>>, %arg5: memref<1x96xf32, #tpu.memory_space<vmem>>, %arg6: memref<32x32xf32, #tpu.memory_space<vmem>>, %arg7: memref<56x32xf32, #tpu.memory_space<vmem>>) attributes {dimension_semantics = [#tpu.dimension_semantics<parallel>], iteration_bounds = array<i64: 2>, scalar_prefetch = 0 : i64, scratch_operands = 0 : i64, tpu.core_type = #tpu.core_type<tc>, window_params = [{transform_indices = @transform_0, window_bounds = array<i64: 56, 32>}, {transform_indices = @transform_1, window_bounds = array<i64: 56, 48>}, {transform_indices = @transform_2, window_bounds = array<i64: 56, 32>}, {pipeline_mode = #tpu.pipeline_mode<synchronous>, transform_indices = @transform_3, window_bounds = array<i64: 112, 96>}, {pipeline_mode = #tpu.pipeline_mode<synchronous>, transform_indices = @transform_4, window_bounds = array<i64: 1, 96>}, {pipeline_mode = #tpu.pipeline_mode<synchronous>, transform_indices = @transform_5, window_bounds = array<i64: 32, 32>}, {transform_indices = @transform_6, window_bounds = array<i64: 56, 32>}]} {
    %c0 = arith.constant 0 : index
    %c0_0 = arith.constant 0 : index
    %0 = vector.load %arg1[%c0, %c0_0] : memref<56x32xf32, #tpu.memory_space<vmem>>, vector<56x32xf32>
    %c0_1 = arith.constant 0 : index
    %c0_2 = arith.constant 0 : index
    %1 = vector.load %arg2[%c0_1, %c0_2] : memref<56x48xf32, #tpu.memory_space<vmem>>, vector<56x48xf32>
    %cst = arith.constant 2.500000e-01 : f32
    %2 = vector.broadcast %cst : f32 to vector<56x48xf32>
    %3 = arith.mulf %1, %2 : vector<56x48xf32>
    %c0_3 = arith.constant 0 : index
    %c0_4 = arith.constant 0 : index
    %4 = vector.load %arg3[%c0_3, %c0_4] : memref<56x32xf32, #tpu.memory_space<vmem>>, vector<56x32xf32>
    %5 = tpu.concatenate %0, %3, %4 in 1 : vector<56x32xf32>, vector<56x48xf32>, vector<56x32xf32> -> vector<56x112xf32>
    %c0_5 = arith.constant 0 : index
    %c0_6 = arith.constant 0 : index
    %6 = vector.load %arg4[%c0_5, %c0_6] : memref<112x96xf32, #tpu.memory_space<vmem>>, vector<112x96xf32>
    %cst_7 = arith.constant dense<0.000000e+00> : vector<56x96xf32>
    %7 = tpu.matmul %5, %6, %cst_7 {dimension_numbers = #tpu.dot_dimension_numbers<[1], [0], [0], [1], [0, 0, 1, 1], [], []>} : vector<56x112xf32>, vector<112x96xf32>, vector<56x96xf32> -> vector<56x96xf32>
    %c0_8 = arith.constant 0 : index
    %c0_9 = arith.constant 0 : index
    %8 = vector.load %arg5[%c0_8, %c0_9] : memref<1x96xf32, #tpu.memory_space<vmem>>, vector<1x96xf32>
    %9 = vector.broadcast %8 : vector<1x96xf32> to vector<56x96xf32>
    %10 = arith.addf %7, %9 : vector<56x96xf32>
    %11 = vector.extract_strided_slice %10 {offsets = [0, 0], sizes = [56, 64], strides = [1, 1]} : vector<56x96xf32> to vector<56x64xf32>
    %12 = arith.negf %11 : vector<56x64xf32>
    %13 = math.exp %12 : vector<56x64xf32>
    %cst_10 = arith.constant 1.000000e+00 : f32
    %14 = vector.broadcast %cst_10 : f32 to vector<56x64xf32>
    %15 = arith.addf %14, %13 : vector<56x64xf32>
    %16 = arith.divf %14, %15 : vector<56x64xf32>
    %17 = vector.extract_strided_slice %16 {offsets = [0, 0], sizes = [56, 32], strides = [1, 1]} : vector<56x64xf32> to vector<56x32xf32>
    %18 = vector.extract_strided_slice %16 {offsets = [0, 32], sizes = [56, 32], strides = [1, 1]} : vector<56x64xf32> to vector<56x32xf32>
    %19 = vector.extract_strided_slice %10 {offsets = [0, 64], sizes = [56, 32], strides = [1, 1]} : vector<56x96xf32> to vector<56x32xf32>
    %20 = arith.mulf %18, %4 : vector<56x32xf32>
    %c0_11 = arith.constant 0 : index
    %c0_12 = arith.constant 0 : index
    %21 = vector.load %arg6[%c0_11, %c0_12] : memref<32x32xf32, #tpu.memory_space<vmem>>, vector<32x32xf32>
    %cst_13 = arith.constant dense<0.000000e+00> : vector<56x32xf32>
    %22 = tpu.matmul %20, %21, %cst_13 {dimension_numbers = #tpu.dot_dimension_numbers<[1], [0], [0], [1], [0, 0, 1, 1], [], []>} : vector<56x32xf32>, vector<32x32xf32>, vector<56x32xf32> -> vector<56x32xf32>
    %23 = arith.addf %19, %22 : vector<56x32xf32>
    %24 = math.tanh %23 : vector<56x32xf32>
    %cst_14 = arith.constant 1.000000e+00 : f32
    %25 = vector.broadcast %cst_14 : f32 to vector<56x32xf32>
    %26 = arith.subf %25, %17 : vector<56x32xf32>
    %27 = arith.mulf %26, %4 : vector<56x32xf32>
    %28 = arith.mulf %17, %24 : vector<56x32xf32>
    %29 = arith.addf %27, %28 : vector<56x32xf32>
    %c0_15 = arith.constant 0 : index
    %c0_16 = arith.constant 0 : index
    %30 = vector.load %arg7[%c0_15, %c0_16] : memref<56x32xf32, #tpu.memory_space<vmem>>, vector<56x32xf32>
    tpu.vector_store %arg7[%c0_15, %c0_16], %29 {strides = array<i32>} : memref<56x32xf32, #tpu.memory_space<vmem>>, vector<56x32xf32>,
    return
  }
  func.func @transform_0(%arg0: i32) -> (i32, i32) {
    %c0_i32 = arith.constant 0 : i32
    %c0_i32_0 = arith.constant 0 : i32
    return %arg0, %c0_i32 : i32, i32
  }
  func.func @transform_1(%arg0: i32) -> (i32, i32) {
    %c0_i32 = arith.constant 0 : i32
    %c0_i32_0 = arith.constant 0 : i32
    return %arg0, %c0_i32 : i32, i32
  }
  func.func @transform_2(%arg0: i32) -> (i32, i32) {
    %c0_i32 = arith.constant 0 : i32
    %c0_i32_0 = arith.constant 0 : i32
    return %arg0, %c0_i32 : i32, i32
  }
  func.func @transform_3(%arg0: i32) -> (i32, i32) {
    %c0_i32 = arith.constant 0 : i32
    %c0_i32_0 = arith.constant 0 : i32
    %c0_i32_1 = arith.constant 0 : i32
    return %c0_i32, %c0_i32_0 : i32, i32
  }
  func.func @transform_4(%arg0: i32) -> (i32, i32) {
    %c0_i32 = arith.constant 0 : i32
    %c0_i32_0 = arith.constant 0 : i32
    %c0_i32_1 = arith.constant 0 : i32
    return %c0_i32, %c0_i32_0 : i32, i32
  }
  func.func @transform_5(%arg0: i32) -> (i32, i32) {
    %c0_i32 = arith.constant 0 : i32
    %c0_i32_0 = arith.constant 0 : i32
    %c0_i32_1 = arith.constant 0 : i32
    return %c0_i32, %c0_i32_0 : i32, i32
  }
  func.func @transform_6(%arg0: i32) -> (i32, i32) {
    %c0_i32 = arith.constant 0 : i32
    %c0_i32_0 = arith.constant 0 : i32
    return %arg0, %c0_i32 : i32, i32
  }
}

</mosaic_0001>

<llo_original>
// kernel: tpu_custom_call.1
$region0: #{tpu_custom_call.1}
  #allocation0 [shape = 'u32[]', space=smem, size = 0x4, offset = 0x4, fixed_abs, tag = 'smem constant byte address 0x4 - core index']
  #allocation1 [shape = 'u32[144,128]{1,0:T(1,128)}', space=vmem, size = 0x12000, scoped, tag = 'internal scratch']
  %s0 = inlined_call_operand.vmem [shape: f32[100,32], index: 0, kind: input, shape index: {}]
  %s1 = inlined_call_operand.vmem [shape: f32[100,48], index: 1, kind: input, shape index: {}]
  %s2 = inlined_call_operand.vmem [shape: f32[100,32], index: 2, kind: input, shape index: {}]
  %s3 = inlined_call_operand.vmem [shape: f32[112,96], index: 3, kind: input, shape index: {}]
  %s4 = inlined_call_operand.vmem [shape: f32[1,96], index: 4, kind: input, shape index: {}]
  %s5 = inlined_call_operand.vmem [shape: f32[32,32], index: 5, kind: input, shape index: {}]
  %s6 = inlined_call_operand.vmem [shape: f32[100,32], index: 6, kind: output, shape index: {}]
  %s7 = sld [smem:[#allocation0]]
  $region105: #{tpu_custom_call.1} parent=0
    _
  %s9 = ssub.s32 1, %s7
  %s10 = scalar_select 0, %s9, %s7
  $region1: #{tpu_custom_call.1} parent=0
    #allocation2 [shape = 'u8[57344]{0}', space=vmem, size = 0xe000, scoped, tag = 'output window, operand 0']
    loop: start=0, step=1, limit=4
    $region2: #{tpu_custom_call.1} parent=1 // loop_pre_header
      _
    $region3: #{tpu_custom_call.1} parent=1 // loop_header
      %s12 = sphi 0, %s16
      %p13 = scmp.ge.s32.totalorder %s12, 4
      %s22 = sphi 0, %s24
      %s25 = sphi 0, %s22
      %s26 = sphi 0, %s25
      %s42 = sphi 0, %s26
      %s48 = sphi 0, %s50
      %s51 = sphi 0, %s48
      %s52 = sphi 0, %s51
      %s68 = sphi 0, %s52
      %s74 = sphi 0, %s76
      %s77 = sphi 0, %s74
      %s78 = sphi 0, %s77
      %s94 = sphi 0, %s78
      %s98 = sphi 0, %s98
      %s100 = sphi 0, %s98
      %s101 = sphi 0, %s100
      %s115 = sphi 0, %s101
      %s119 = sphi 0, %s119
      %s121 = sphi 0, %s119
      %s122 = sphi 0, %s121
      %s136 = sphi 0, %s122
      %s140 = sphi 0, %s140
      %s142 = sphi 0, %s140
      %s143 = sphi 0, %s142
      %s157 = sphi 0, %s143
      %s163 = sphi 0, %s165
      %s166 = sphi 0, %s163
      %s167 = sphi 0, %s166
      %s183 = sphi 0, %s167
    $region4: #{tpu_custom_call.1} parent=1 // loop_header_branch
      %15 = sbr.rel (%p13) target = $region8
    $region5: #{tpu_custom_call.1} parent=1 // loop_body
      %s17 = ssub.s32 %s12, 1
      %s18 = ssub.s32 %s12, 2
      %s19 = sadd.s32 %s12, 1
      %s20 = ssub.s32 %s12, %s19
      %p21 = scmp.eq.s32.totalorder %s20, 0
      %s23 = sadd.s32 %s22, 1
      %s24 = scalar_select %p21, %s22, %s23
      %p27 = pneg %p21
      %p28 = scmp.eq.s32.totalorder %s12, 1
      %p29 = por %p27, %p28
      %p30 = scmp.ne.s32.totalorder %s22, %s25
      %p31 = scmp.eq.s32.totalorder %s12, 0
      %p32 = por %p30, %p31
      %p33 = scmp.ne.s32.totalorder %s22, %s25
      %p34 = scmp.eq.s32.totalorder %s17, 1
      %p35 = por %p33, %p34
      %p36 = scmp.ne.s32.totalorder %s25, %s26
      %p37 = scmp.eq.s32.totalorder %s17, 0
      %p38 = por %p36, %p37
      %p39 = scmp.ne.s32.totalorder %s25, %s26
      %p40 = scmp.eq.s32.totalorder %s18, 1
      %p41 = por %p39, %p40
      %p43 = scmp.ne.s32.totalorder %s26, %s42
      %p44 = scmp.eq.s32.totalorder %s18, 0
      %p45 = por %p43, %p44
      %s46 = ssub.s32 %s12, %s19
      %p47 = scmp.eq.s32.totalorder %s46, 0
      %s49 = sadd.s32 %s48, 1
      %s50 = scalar_select %p47, %s48, %s49
      %p53 = pneg %p47
      %p54 = scmp.eq.s32.totalorder %s12, 1
      %p55 = por %p53, %p54
      %p56 = scmp.ne.s32.totalorder %s48, %s51
      %p57 = scmp.eq.s32.totalorder %s12, 0
      %p58 = por %p56, %p57
      %p59 = scmp.ne.s32.totalorder %s48, %s51
      %p60 = scmp.eq.s32.totalorder %s17, 1
      %p61 = por %p59, %p60
      %p62 = scmp.ne.s32.totalorder %s51, %s52
      %p63 = scmp.eq.s32.totalorder %s17, 0
      %p64 = por %p62, %p63
      %p65 = scmp.ne.s32.totalorder %s51, %s52
      %p66 = scmp.eq.s32.totalorder %s18, 1
      %p67 = por %p65, %p66
      %p69 = scmp.ne.s32.totalorder %s52, %s68
      %p70 = scmp.eq.s32.totalorder %s18, 0
      %p71 = por %p69, %p70
      %s72 = ssub.s32 %s12, %s19
      %p73 = scmp.eq.s32.totalorder %s72, 0
      %s75 = sadd.s32 %s74, 1
      %s76 = scalar_select %p73, %s74, %s75
      %p79 = pneg %p73
      %p80 = scmp.eq.s32.totalorder %s12, 1
      %p81 = por %p79, %p80
      %p82 = scmp.ne.s32.totalorder %s74, %s77
      %p83 = scmp.eq.s32.totalorder %s12, 0
      %p84 = por %p82, %p83
      %p85 = scmp.ne.s32.totalorder %s74, %s77
      %p86 = scmp.eq.s32.totalorder %s17, 1
      %p87 = por %p85, %p86
      %p88 = scmp.ne.s32.totalorder %s77, %s78
      %p89 = scmp.eq.s32.totalorder %s17, 0
      %p90 = por %p88, %p89
      %p91 = scmp.ne.s32.totalorder %s77, %s78
      %p92 = scmp.eq.s32.totalorder %s18, 1
      %p93 = por %p91, %p92
      %p95 = scmp.ne.s32.totalorder %s78, %s94
      %p96 = scmp.eq.s32.totalorder %s18, 0
      %p97 = por %p95, %p96
      %s99 = sadd.s32 %s98, 1
      %p102 = scmp.eq.s32.totalorder %s12, 1
      %p103 = scmp.ne.s32.totalorder %s98, %s100
      %p104 = scmp.eq.s32.totalorder %s12, 0
      %p105 = por %p103, %p104
      %p106 = scmp.ne.s32.totalorder %s98, %s100
      %p107 = scmp.eq.s32.totalorder %s17, 1
      %p108 = por %p106, %p107
      %p109 = scmp.ne.s32.totalorder %s100, %s101
      %p110 = scmp.eq.s32.totalorder %s17, 0
      %p111 = por %p109, %p110
      %p112 = scmp.ne.s32.totalorder %s100, %s101
      %p113 = scmp.eq.s32.totalorder %s18, 1
      %p114 = por %p112, %p113
      %p116 = scmp.ne.s32.totalorder %s101, %s115
      %p117 = scmp.eq.s32.totalorder %s18, 0
      %p118 = por %p116, %p117
      %s120 = sadd.s32 %s119, 1
      %p123 = scmp.eq.s32.totalorder %s12, 1
      %p124 = scmp.ne.s32.totalorder %s119, %s121
      %p125 = scmp.eq.s32.totalorder %s12, 0
      %p126 = por %p124, %p125
      %p127 = scmp.ne.s32.totalorder %s119, %s121
      %p128 = scmp.eq.s32.totalorder %s17, 1
      %p129 = por %p127, %p128
      %p130 = scmp.ne.s32.totalorder %s121, %s122
      %p131 = scmp.eq.s32.totalorder %s17, 0
      %p132 = por %p130, %p131
      %p133 = scmp.ne.s32.totalorder %s121, %s122
      %p134 = scmp.eq.s32.totalorder %s18, 1
      %p135 = por %p133, %p134
      %p137 = scmp.ne.s32.totalorder %s122, %s136
      %p138 = scmp.eq.s32.totalorder %s18, 0
      %p139 = por %p137, %p138
      %s141 = sadd.s32 %s140, 1
      %p144 = scmp.eq.s32.totalorder %s12, 1
      %p145 = scmp.ne.s32.totalorder %s140, %s142
      %p146 = scmp.eq.s32.totalorder %s12, 0
      %p147 = por %p145, %p146
      %p148 = scmp.ne.s32.totalorder %s140, %s142
      %p149 = scmp.eq.s32.totalorder %s17, 1
      %p150 = por %p148, %p149
      %p151 = scmp.ne.s32.totalorder %s142, %s143
      %p152 = scmp.eq.s32.totalorder %s17, 0
      %p153 = por %p151, %p152
      %p154 = scmp.ne.s32.totalorder %s142, %s143
      %p155 = scmp.eq.s32.totalorder %s18, 1
      %p156 = por %p154, %p155
      %p158 = scmp.ne.s32.totalorder %s143, %s157
      %p159 = scmp.eq.s32.totalorder %s18, 0
      %p160 = por %p158, %p159
      %s161 = ssub.s32 %s12, %s19
      %p162 = scmp.eq.s32.totalorder %s161, 0
      %s164 = sadd.s32 %s163, 1
      %s165 = scalar_select %p162, %s163, %s164
      %p168 = pneg %p162
      %p169 = scmp.eq.s32.totalorder %s12, 1
      %p170 = por %p168, %p169
      %p171 = scmp.ne.s32.totalorder %s163, %s166
      %p172 = scmp.eq.s32.totalorder %s12, 0
      %p173 = por %p171, %p172
      %p174 = scmp.ne.s32.totalorder %s163, %s166
      %p175 = scmp.eq.s32.totalorder %s17, 1
      %p176 = por %p174, %p175
      %p177 = scmp.ne.s32.totalorder %s166, %s167
      %p178 = scmp.eq.s32.totalorder %s17, 0
      %p179 = por %p177, %p178
      %p180 = scmp.ne.s32.totalorder %s166, %s167
      %p181 = scmp.eq.s32.totalorder %s18, 1
      %p182 = por %p180, %p181
      %p184 = scmp.ne.s32.totalorder %s167, %s183
      %p185 = scmp.eq.s32.totalorder %s18, 0
      %p186 = por %p184, %p185
      %p187 = scmp.le.s32.totalorder 1, %s12
      %p188 = scmp.lt.s32.totalorder %s12, 3
      %p189 = pnand %p187, %p188
      %p190 = pneg %p189
      // Predicated region
      $region9: #{tpu_custom_call.1} parent=5 // pred_check
        _
      $region10: #{tpu_custom_call.1} parent=5 // pred_check_branch
        %192 = sbr.rel (%p189) target = $region12
      $region11: #{tpu_custom_call.1} parent=5 // pred_region
        %s193 = ssub.s32 %s12, 1
        // Predicated region
        $region13: #{tpu_custom_call.1} parent=11 // pred_check
          %p194 = pneg %p111
        $region14: #{tpu_custom_call.1} parent=11 // pred_check_branch
          %196 = sbr.rel (%p194) target = $region16
        $region15: #{tpu_custom_call.1} parent=11 // pred_region
          _
        $region16: #{tpu_custom_call.1} parent=11 // pred_fallthru
          _
        // Predicated region
        $region17: #{tpu_custom_call.1} parent=11 // pred_check
          %p197 = pneg %p132
        $region18: #{tpu_custom_call.1} parent=11 // pred_check_branch
          %199 = sbr.rel (%p197) target = $region20
        $region19: #{tpu_custom_call.1} parent=11 // pred_region
          _
        $region20: #{tpu_custom_call.1} parent=11 // pred_fallthru
          _
        // Predicated region
        $region21: #{tpu_custom_call.1} parent=11 // pred_check
          %p200 = pneg %p153
        $region22: #{tpu_custom_call.1} parent=11 // pred_check_branch
          %202 = sbr.rel (%p200) target = $region24
        $region23: #{tpu_custom_call.1} parent=11 // pred_region
          _
        $region24: #{tpu_custom_call.1} parent=11 // pred_fallthru
          _
      $region12: #{tpu_custom_call.1} parent=5 // pred_fallthru
        _
      %p203 = scmp.lt.s32.totalorder %s12, 2
      // Predicated region
      $region25: #{tpu_custom_call.1} parent=5 // pred_check
        %p204 = pneg %p203
      $region26: #{tpu_custom_call.1} parent=5 // pred_check_branch
        %206 = sbr.rel (%p204) target = $region28
      $region27: #{tpu_custom_call.1} parent=5 // pred_region
        // Predicated region
        $region29: #{tpu_custom_call.1} parent=27 // pred_check
          %p207 = pneg %p32
        $region30: #{tpu_custom_call.1} parent=27 // pred_check_branch
          %209 = sbr.rel (%p207) target = $region32
        $region31: #{tpu_custom_call.1} parent=27 // pred_region
          %s210 = smul.u32 7, %s12
          %s211 = ssub.s32 13, %s210
          %p212 = scmp.lt.s32.totalorder %s211, 7
          %s213 = scalar_select %p212, %s211, 7
          %s214 = smul.u32 128, %s213
          %p215 = scmp.lt.s32.totalorder %s210, 12
          %s216 = scalar_select %p215, %s210, 12
          %s217 = smul.addr %s216, 8
          %s218 = scalar_lea.vmem %s0, %s217
          %s219 = smul.u32 7, %s12
          %s220 = ssub.s32 13, %s219
          %p221 = scmp.lt.s32.totalorder %s220, 7
          %s222 = scalar_select %p221, %s220, 7
          %s223 = smul.u32 128, %s222
        $region32: #{tpu_custom_call.1} parent=27 // pred_fallthru
          _
        // Predicated region
        $region33: #{tpu_custom_call.1} parent=27 // pred_check
          %p224 = pneg %p58
        $region34: #{tpu_custom_call.1} parent=27 // pred_check_branch
          %226 = sbr.rel (%p224) target = $region36
        $region35: #{tpu_custom_call.1} parent=27 // pred_region
          %s227 = smul.u32 7, %s12
          %s228 = ssub.s32 13, %s227
          %p229 = scmp.lt.s32.totalorder %s228, 7
          %s230 = scalar_select %p229, %s228, 7
          %s231 = smul.u32 128, %s230
          %p232 = scmp.lt.s32.totalorder %s227, 12
          %s233 = scalar_select %p232, %s227, 12
          %s234 = smul.addr %s233, 8
          %s235 = scalar_lea.vmem %s1, %s234
          %s236 = smul.u32 7, %s12
          %s237 = ssub.s32 13, %s236
          %p238 = scmp.lt.s32.totalorder %s237, 7
          %s239 = scalar_select %p238, %s237, 7
          %s240 = smul.u32 128, %s239
        $region36: #{tpu_custom_call.1} parent=27 // pred_fallthru
          _
        // Predicated region
        $region37: #{tpu_custom_call.1} parent=27 // pred_check
          %p241 = pneg %p84
        $region38: #{tpu_custom_call.1} parent=27 // pred_check_branch
          %243 = sbr.rel (%p241) target = $region40
        $region39: #{tpu_custom_call.1} parent=27 // pred_region
          %s244 = smul.u32 7, %s12
          %s245 = ssub.s32 13, %s244
          %p246 = scmp.lt.s32.totalorder %s245, 7
          %s247 = scalar_select %p246, %s245, 7
          %s248 = smul.u32 128, %s247
          %p249 = scmp.lt.s32.totalorder %s244, 12
          %s250 = scalar_select %p249, %s244, 12
          %s251 = smul.addr %s250, 8
          %s252 = scalar_lea.vmem %s2, %s251
          %s253 = smul.u32 7, %s12
          %s254 = ssub.s32 13, %s253
          %p255 = scmp.lt.s32.totalorder %s254, 7
          %s256 = scalar_select %p255, %s254, 7
          %s257 = smul.u32 128, %s256
        $region40: #{tpu_custom_call.1} parent=27 // pred_fallthru
          _
      $region28: #{tpu_custom_call.1} parent=5 // pred_fallthru
        _
      %p258 = scmp.le.s32.totalorder 1, %s12
      %p259 = scmp.lt.s32.totalorder %s12, 3
      %p260 = pnand %p258, %p259
      %p261 = pneg %p260
      // Predicated region
      $region41: #{tpu_custom_call.1} parent=5 // pred_check
        _
      $region42: #{tpu_custom_call.1} parent=5 // pred_check_branch
        %263 = sbr.rel (%p260) target = $region44
      $region43: #{tpu_custom_call.1} parent=5 // pred_region
        %s264 = ssub.s32 %s12, 1
        %s265 = smul.u32 7, %s17
        %s266 = ssub.s32 13, %s265
        %p267 = scmp.lt.s32.totalorder %s266, 7
        %s268 = scalar_select %p267, %s266, 7
        %s269 = smul.u32 128, %s268
        %p270 = scmp.lt.s32.totalorder %s265, 12
        %s271 = scalar_select %p270, %s265, 12
        %s272 = smul.addr %s271, 8
        %s273 = scalar_lea.vmem %s0, %s272
        %p274 = pneg %p38
        %p275 = pneg %p35
        %s276 = smul.u32 7, %s17
        %s277 = ssub.s32 13, %s276
        %p278 = scmp.lt.s32.totalorder %s277, 7
        %s279 = scalar_select %p278, %s277, 7
        %s280 = smul.u32 128, %s279
        %p281 = scmp.lt.s32.totalorder %s276, 12
        %s282 = scalar_select %p281, %s276, 12
        %s283 = smul.addr %s282, 8
        %s284 = scalar_lea.vmem %s1, %s283
        %p285 = pneg %p64
        %p286 = pneg %p61
        %s287 = smul.u32 7, %s17
        %s288 = ssub.s32 13, %s287
        %p289 = scmp.lt.s32.totalorder %s288, 7
        %s290 = scalar_select %p289, %s288, 7
        %s291 = smul.u32 128, %s290
        %p292 = scmp.lt.s32.totalorder %s287, 12
        %s293 = scalar_select %p292, %s287, 12
        %s294 = smul.addr %s293, 8
        %s295 = scalar_lea.vmem %s2, %s294
        %p296 = pneg %p90
        %p297 = pneg %p87
        %p298 = pneg %p111
        %p299 = pneg %p108
        %p300 = pneg %p132
        %p301 = pneg %p129
        %p302 = pneg %p153
        %p303 = pneg %p150
        %p304 = pneg %p179
        %p305 = pneg %p176
        %s306 = sand.u32 %s166, 1
        %s307 = sand.u32 %s166, 1
        %s308 = smul.addr %s307, 56
        %s309 = scalar_lea.vmem [#allocation2], %s308
        %s310 = smul.u32 7, %s17
        %s311 = ssub.s32 13, %s310
        %p312 = scmp.lt.s32.totalorder %s311, 7
        %s313 = scalar_select %p312, %s311, 7
        %s314 = smul.u32 128, %s313
        %p315 = scmp.lt.s32.totalorder %s310, 12
        %s316 = scalar_select %p315, %s310, 12
        %s317 = smul.addr %s316, 8
        %s318 = scalar_lea.vmem %s0, %s317
        %s319 = smul.u32 7, %s17
        %s320 = ssub.s32 13, %s319
        %p321 = scmp.lt.s32.totalorder %s320, 7
        %s322 = scalar_select %p321, %s320, 7
        %s323 = smul.u32 128, %s322
        %s324 = smul.u32 7, %s17
        %s325 = ssub.s32 13, %s324
        %p326 = scmp.lt.s32.totalorder %s325, 7
        %s327 = scalar_select %p326, %s325, 7
        %s328 = smul.u32 128, %s327
        %p329 = scmp.lt.s32.totalorder %s324, 12
        %s330 = scalar_select %p329, %s324, 12
        %s331 = smul.addr %s330, 8
        %s332 = scalar_lea.vmem %s1, %s331
        %s333 = smul.u32 7, %s17
        %s334 = ssub.s32 13, %s333
        %p335 = scmp.lt.s32.totalorder %s334, 7
        %s336 = scalar_select %p335, %s334, 7
        %s337 = smul.u32 128, %s336
        %s338 = smul.u32 7, %s17
        %s339 = ssub.s32 13, %s338
        %p340 = scmp.lt.s32.totalorder %s339, 7
        %s341 = scalar_select %p340, %s339, 7
        %s342 = smul.u32 128, %s341
        %p343 = scmp.lt.s32.totalorder %s338, 12
        %s344 = scalar_select %p343, %s338, 12
        %s345 = smul.addr %s344, 8
        %s346 = scalar_lea.vmem %s2, %s345
        %s347 = smul.u32 7, %s17
        %s348 = ssub.s32 13, %s347
        %p349 = scmp.lt.s32.totalorder %s348, 7
        %s350 = scalar_select %p349, %s348, 7
        %s351 = smul.u32 128, %s350
        %s352 = smul.u32 7, %s17
        %s353 = ssub.s32 13, %s352
        %p354 = scmp.lt.s32.totalorder %s353, 7
        %s355 = scalar_select %p354, %s353, 7
        %s356 = smul.u32 128, %s355
        %v357 = vld [vmem:[%s318] sm:$0xff]
        %v358 = vld [vmem:[%s318 + $0x8] sm:$0xff]
        %v359 = vld [vmem:[%s318 + $0x10] sm:$0xff]
        %v360 = vld [vmem:[%s318 + $0x18] sm:$0xff]
        %v361 = vld [vmem:[%s318 + $0x20] sm:$0xff]
        %v362 = vld [vmem:[%s318 + $0x28] sm:$0xff]
        %v363 = vld [vmem:[%s318 + $0x30] sm:$0xff]
        %v364 = vld [vmem:[%s332] sm:$0xff]
        %v365 = vld [vmem:[%s332 + $0x8] sm:$0xff]
        %v366 = vld [vmem:[%s332 + $0x10] sm:$0xff]
        %v367 = vld [vmem:[%s332 + $0x18] sm:$0xff]
        %v368 = vld [vmem:[%s332 + $0x20] sm:$0xff]
        %v369 = vld [vmem:[%s332 + $0x28] sm:$0xff]
        %v370 = vld [vmem:[%s332 + $0x30] sm:$0xff]
        %v371 = vmul.f32 %v364, 0.25
        %v372 = vmul.f32 %v365, 0.25
        %v373 = vmul.f32 %v366, 0.25
        %v374 = vmul.f32 %v367, 0.25
        %v375 = vmul.f32 %v368, 0.25
        %v376 = vmul.f32 %v369, 0.25
        %v377 = vmul.f32 %v370, 0.25
        %v378 = vld [vmem:[%s346] sm:$0xff]
        %v379 = vld [vmem:[%s346 + $0x8] sm:$0xff]
        %v380 = vld [vmem:[%s346 + $0x10] sm:$0xff]
        %v381 = vld [vmem:[%s346 + $0x18] sm:$0xff]
        %v382 = vld [vmem:[%s346 + $0x20] sm:$0xff]
        %v383 = vld [vmem:[%s346 + $0x28] sm:$0xff]
        %v384 = vld [vmem:[%s346 + $0x30] sm:$0xff]
        %392 = vrot.lane.b32.xlu0 %v371, 32
        %v393 = vpop.permute.xlu0 %392
        %394 = vrot.lane.b32.xlu0 %v372, 32
        %v395 = vpop.permute.xlu0 %394
        %396 = vrot.lane.b32.xlu0 %v373, 32
        %v397 = vpop.permute.xlu0 %396
        %398 = vrot.lane.b32.xlu0 %v374, 32
        %v399 = vpop.permute.xlu0 %398
        %400 = vrot.lane.b32.xlu0 %v375, 32
        %v401 = vpop.permute.xlu0 %400
        %402 = vrot.lane.b32.xlu0 %v376, 32
        %v403 = vpop.permute.xlu0 %402
        %404 = vrot.lane.b32.xlu0 %v377, 32
        %v405 = vpop.permute.xlu0 %404
        %420 = vrot.lane.b32.xlu0 %v378, 80
        %v421 = vpop.permute.xlu0 %420
        %422 = vrot.lane.b32.xlu0 %v379, 80
        %v423 = vpop.permute.xlu0 %422
        %424 = vrot.lane.b32.xlu0 %v380, 80
        %v425 = vpop.permute.xlu0 %424
        %426 = vrot.lane.b32.xlu0 %v381, 80
        %v427 = vpop.permute.xlu0 %426
        %428 = vrot.lane.b32.xlu0 %v382, 80
        %v429 = vpop.permute.xlu0 %428
        %430 = vrot.lane.b32.xlu0 %v383, 80
        %v431 = vpop.permute.xlu0 %430
        %432 = vrot.lane.b32.xlu0 %v384, 80
        %v433 = vpop.permute.xlu0 %432
        %vm441 = vcmask 261120
        %v442 = vsel %vm441, %v357, %v393
        %v443 = vsel %vm441, %v358, %v395
        %v444 = vsel %vm441, %v359, %v397
        %v445 = vsel %vm441, %v360, %v399
        %v446 = vsel %vm441, %v361, %v401
        %v447 = vsel %vm441, %v362, %v403
        %v448 = vsel %vm441, %v363, %v405
        %vm449 = vcmask 654336
        %v450 = vsel %vm449, %v442, %v421
        %v451 = vsel %vm449, %v443, %v423
        %v452 = vsel %vm449, %v444, %v425
        %v453 = vsel %vm449, %v445, %v427
        %v454 = vsel %vm449, %v446, %v429
        %v455 = vsel %vm449, %v447, %v431
        %v456 = vsel %vm449, %v448, %v433
        %v457 = vld [vmem:[%s3] sm:$0xff]
        %v458 = vld [vmem:[%s3 + $0x8] sm:$0xff]
        %v459 = vld [vmem:[%s3 + $0x10] sm:$0xff]
        %v460 = vld [vmem:[%s3 + $0x18] sm:$0xff]
        %v461 = vld [vmem:[%s3 + $0x20] sm:$0xff]
        %v462 = vld [vmem:[%s3 + $0x28] sm:$0xff]
        %v463 = vld [vmem:[%s3 + $0x30] sm:$0xff]
        %v464 = vld [vmem:[%s3 + $0x38] sm:$0xff]
        %v465 = vld [vmem:[%s3 + $0x40] sm:$0xff]
        %v466 = vld [vmem:[%s3 + $0x48] sm:$0xff]
        %v467 = vld [vmem:[%s3 + $0x50] sm:$0xff]
        %v468 = vld [vmem:[%s3 + $0x58] sm:$0xff]
        %v469 = vld [vmem:[%s3 + $0x60] sm:$0xff]
        %v470 = vld [vmem:[%s3 + $0x68] sm:$0xff]
        %v471 = vld [vmem:[%s4] sm:$0x1]
        %v473 = vlaneseq
        %v474 = vshrl.u32 %v473, 7
        %v475 = vsub.s32 0, %v474
        %v476 = vrot.slane %v471, %v475
        %vm478 = vcmask 916480
        %v480 = vsel %vm478, %v450, 0
        %v483 = vsel %vm478, %v451, 0
        %v486 = vsel %vm478, %v452, 0
        %v489 = vsel %vm478, %v453, 0
        %v492 = vsel %vm478, %v454, 0
        %v495 = vsel %vm478, %v455, 0
        %v498 = vsel %vm478, %v456, 0
        %500 = vmatprep.subr.mxu0 0.0
        %501 = vmatpush1.msra.mxu0 %v457
        %502 = vmatprep.subr.mxu0 0.0
        %503 = vmatpush1.msra.mxu0 %v458
        %504 = vmatprep.subr.mxu0 0.0
        %505 = vmatpush1.msra.mxu0 %v459
        %506 = vmatprep.subr.mxu0 0.0
        %507 = vmatpush1.msra.mxu0 %v460
        %508 = vmatprep.subr.mxu0 0.0
        %509 = vmatpush1.msra.mxu0 %v461
        %510 = vmatprep.subr.mxu0 0.0
        %511 = vmatpush1.msra.mxu0 %v462
        %512 = vmatprep.subr.mxu0 0.0
        %513 = vmatpush1.msra.mxu0 %v463
        %514 = vmatprep.subr.mxu0 0.0
        %515 = vmatpush1.msra.mxu0 %v464
        %516 = vmatprep.subr.mxu0 0.0
        %517 = vmatpush1.msra.mxu0 %v465
        %518 = vmatprep.subr.mxu0 0.0
        %519 = vmatpush1.msra.mxu0 %v466
        %520 = vmatprep.subr.mxu0 0.0
        %521 = vmatpush1.msra.mxu0 %v467
        %522 = vmatprep.subr.mxu0 0.0
        %523 = vmatpush1.msra.mxu0 %v468
        %524 = vmatprep.subr.mxu0 0.0
        %525 = vmatpush1.msra.mxu0 %v469
        %526 = vmatprep.subr.mxu0 0.0
        %527 = vmatpush1.msra.mxu0 %v470
        %528 = vmatprep.subr.mxu0 0.0
        %529 = vmatpush1.msra.mxu0 0.0
        %530 = vmatprep.subr.mxu0 0.0
        %531 = vmatpush1.msra.mxu0 0.0
        %532 = vmatprep.subr.mxu0 0.0
        %533 = vmatpush1.msra.mxu0 0.0
        %534 = vmatprep.subr.mxu0 0.0
        %535 = vmatpush1.msra.mxu0 0.0
        %536 = vmatprep.subr.mxu0 0.0
        %537 = vmatpush1.msra.mxu0 0.0
        %538 = vmatprep.subr.mxu0 0.0
        %539 = vmatpush1.msra.mxu0 0.0
        %540 = vmatprep.subr.mxu0 0.0
        %541 = vmatpush1.msra.mxu0 0.0
        %542 = vmatprep.subr.mxu0 0.0
        %543 = vmatpush1.msra.mxu0 0.0
        %544 = vmatprep.subr.mxu0 0.0
        %545 = vmatpush1.msra.mxu0 0.0
        %546 = vmatprep.subr.mxu0 0.0
        %547 = vmatpush1.msra.mxu0 0.0
        %548 = vmatprep.subr.mxu0 0.0
        %549 = vmatpush1.msra.mxu0 0.0
        %550 = vmatprep.subr.mxu0 0.0
        %551 = vmatpush1.msra.mxu0 0.0
        %552 = vmatprep.subr.mxu0 0.0
        %553 = vmatpush1.msra.mxu0 0.0
        %554 = vmatprep.subr.mxu0 0.0
        %555 = vmatpush1.msra.mxu0 0.0
        %556 = vmatprep.subr.mxu0 0.0
        %557 = vmatpush1.msra.mxu0 0.0
        %558 = vmatprep.subr.mxu0 0.0
        %559 = vmatpush1.msra.mxu0 0.0
        %560 = vmatprep.subr.mxu0 0.0
        %561 = vmatpush1.msra.mxu0 0.0
        %562 = vmatprep.subr.mxu0 0.0
        %563 = vmatpush1.msra.mxu0 0.0
        %564 = vmatprep.mubr.f32.mxu0 0.0
        %565 = vmatmul.mubr.f32.gmra.mrb[0].mxu0 %v480
        %v566 = vpop.f32.mrb[0].mxu0
        %v567 = vadd.f32 %v476, %v566
        %v568 = vpop.f32.mrb[0].mxu0
        %569 = vmatprep.mubr.f32.mxu0 0.0
        %570 = vmatmul.mubr.f32.gmra.mrb[0].mxu0 %v483
        %v571 = vpop.f32.mrb[0].mxu0
        %v572 = vadd.f32 %v476, %v571
        %v573 = vpop.f32.mrb[0].mxu0
        %574 = vmatprep.mubr.f32.mxu0 0.0
        %575 = vmatmul.mubr.f32.gmra.mrb[0].mxu0 %v486
        %v576 = vpop.f32.mrb[0].mxu0
        %v577 = vadd.f32 %v476, %v576
        %v578 = vpop.f32.mrb[0].mxu0
        %579 = vmatprep.mubr.f32.mxu0 0.0
        %580 = vmatmul.mubr.f32.gmra.mrb[0].mxu0 %v489
        %v581 = vpop.f32.mrb[0].mxu0
        %v582 = vadd.f32 %v476, %v581
        %v583 = vpop.f32.mrb[0].mxu0
        %584 = vmatprep.mubr.f32.mxu0 0.0
        %585 = vmatmul.mubr.f32.gmra.mrb[0].mxu0 %v492
        %v586 = vpop.f32.mrb[0].mxu0
        %v587 = vadd.f32 %v476, %v586
        %v588 = vpop.f32.mrb[0].mxu0
        %589 = vmatprep.mubr.f32.mxu0 0.0
        %590 = vmatmul.mubr.f32.gmra.mrb[0].mxu0 %v495
        %v591 = vpop.f32.mrb[0].mxu0
        %v592 = vadd.f32 %v476, %v591
        %v593 = vpop.f32.mrb[0].mxu0
        %594 = vmatprep.mubr.f32.mxu0 0.0
        %595 = vmatmul.mubr.f32.gmra.mrb[0].mxu0 %v498
        %v596 = vpop.f32.mrb[0].mxu0
        %v597 = vadd.f32 %v476, %v596
        %v598 = vpop.f32.mrb[0].mxu0
        %599 = vdwg.mxu0
        %v600 = vxor.u32 %v567, 2147483648
        %v601 = vxor.u32 %v572, 2147483648
        %v602 = vxor.u32 %v577, 2147483648
        %v603 = vxor.u32 %v582, 2147483648
        %v604 = vxor.u32 %v587, 2147483648
        %v605 = vxor.u32 %v592, 2147483648
        %v606 = vxor.u32 %v597, 2147483648
        %v607 = vmul.f32 %v600, 1.442695
        %v608 = vpow.pop %v607
        %v609 = vmul.f32 %v601, 1.442695
        %v610 = vpow.pop %v609
        %v611 = vmul.f32 %v602, 1.442695
        %v612 = vpow.pop %v611
        %v613 = vmul.f32 %v603, 1.442695
        %v614 = vpow.pop %v613
        %v615 = vmul.f32 %v604, 1.442695
        %v616 = vpow.pop %v615
        %v617 = vmul.f32 %v605, 1.442695
        %v618 = vpow.pop %v617
        %v619 = vmul.f32 %v606, 1.442695
        %v620 = vpow.pop %v619
        %v621 = vadd.f32 %v608, 1.0
        %v622 = vadd.f32 %v610, 1.0
        %v623 = vadd.f32 %v612, 1.0
        %v624 = vadd.f32 %v614, 1.0
        %v625 = vadd.f32 %v616, 1.0
        %v626 = vadd.f32 %v618, 1.0
        %v627 = vadd.f32 %v620, 1.0
        %v628 = vrcp.pop %v621
        %v629 = vmul.f32 1.0, %v628
        %v630 = vrcp.pop %v622
        %v631 = vmul.f32 1.0, %v630
        %v632 = vrcp.pop %v623
        %v633 = vmul.f32 1.0, %v632
        %v634 = vrcp.pop %v624
        %v635 = vmul.f32 1.0, %v634
        %v636 = vrcp.pop %v625
        %v637 = vmul.f32 1.0, %v636
        %v638 = vrcp.pop %v626
        %v639 = vmul.f32 1.0, %v638
        %v640 = vrcp.pop %v627
        %v641 = vmul.f32 1.0, %v640
        %642 = vrot.lane.b32.xlu0 %v378, 32
        %v643 = vpop.permute.xlu0 %642
        %644 = vrot.lane.b32.xlu0 %v379, 32
        %v645 = vpop.permute.xlu0 %644
        %646 = vrot.lane.b32.xlu0 %v380, 32
        %v647 = vpop.permute.xlu0 %646
        %648 = vrot.lane.b32.xlu0 %v381, 32
        %v649 = vpop.permute.xlu0 %648
        %650 = vrot.lane.b32.xlu0 %v382, 32
        %v651 = vpop.permute.xlu0 %650
        %652 = vrot.lane.b32.xlu0 %v383, 32
        %v653 = vpop.permute.xlu0 %652
        %654 = vrot.lane.b32.xlu0 %v384, 32
        %v655 = vpop.permute.xlu0 %654
        %v663 = vmul.f32 %v629, %v643
        %v664 = vmul.f32 %v631, %v645
        %v665 = vmul.f32 %v633, %v647
        %v666 = vmul.f32 %v635, %v649
        %v667 = vmul.f32 %v637, %v651
        %v668 = vmul.f32 %v639, %v653
        %v669 = vmul.f32 %v641, %v655
        %v670 = vld [vmem:[%s5] sm:$0xff]
        %v671 = vld [vmem:[%s5 + $0x8] sm:$0xff]
        %v672 = vld [vmem:[%s5 + $0x10] sm:$0xff]
        %v673 = vld [vmem:[%s5 + $0x18] sm:$0xff]
        %681 = vrot.lane.b32.xlu0 %v663, 96
        %v682 = vpop.permute.xlu0 %681
        %683 = vrot.lane.b32.xlu0 %v664, 96
        %v684 = vpop.permute.xlu0 %683
        %685 = vrot.lane.b32.xlu0 %v665, 96
        %v686 = vpop.permute.xlu0 %685
        %687 = vrot.lane.b32.xlu0 %v666, 96
        %v688 = vpop.permute.xlu0 %687
        %689 = vrot.lane.b32.xlu0 %v667, 96
        %v690 = vpop.permute.xlu0 %689
        %691 = vrot.lane.b32.xlu0 %v668, 96
        %v692 = vpop.permute.xlu0 %691
        %693 = vrot.lane.b32.xlu0 %v669, 96
        %v694 = vpop.permute.xlu0 %693
        %v695 = vsel %vm441, %v682, 0
        %v697 = vsel %vm441, %v684, 0
        %v699 = vsel %vm441, %v686, 0
        %v701 = vsel %vm441, %v688, 0
        %v703 = vsel %vm441, %v690, 0
        %v705 = vsel %vm441, %v692, 0
        %v707 = vsel %vm441, %v694, 0
        %709 = vmatprep.subr.mxu0 0.0
        %710 = vmatpush1.msra.mxu0 %v670
        %711 = vmatprep.subr.mxu0 0.0
        %712 = vmatpush1.msra.mxu0 %v671
        %713 = vmatprep.subr.mxu0 0.0
        %714 = vmatpush1.msra.mxu0 %v672
        %715 = vmatprep.subr.mxu0 0.0
        %716 = vmatpush1.msra.mxu0 %v673
        %717 = vmatprep.subr.mxu0 0.0
        %718 = vmatpush1.msra.mxu0 0.0
        %719 = vmatprep.subr.mxu0 0.0
        %720 = vmatpush1.msra.mxu0 0.0
        %721 = vmatprep.subr.mxu0 0.0
        %722 = vmatpush1.msra.mxu0 0.0
        %723 = vmatprep.subr.mxu0 0.0
        %724 = vmatpush1.msra.mxu0 0.0
        %725 = vmatprep.subr.mxu0 0.0
        %726 = vmatpush1.msra.mxu0 0.0
        %727 = vmatprep.subr.mxu0 0.0
        %728 = vmatpush1.msra.mxu0 0.0
        %729 = vmatprep.subr.mxu0 0.0
        %730 = vmatpush1.msra.mxu0 0.0
        %731 = vmatprep.subr.mxu0 0.0
        %732 = vmatpush1.msra.mxu0 0.0
        %733 = vmatprep.subr.mxu0 0.0
        %734 = vmatpush1.msra.mxu0 0.0
        %735 = vmatprep.subr.mxu0 0.0
        %736 = vmatpush1.msra.mxu0 0.0
        %737 = vmatprep.subr.mxu0 0.0
        %738 = vmatpush1.msra.mxu0 0.0
        %739 = vmatprep.subr.mxu0 0.0
        %740 = vmatpush1.msra.mxu0 0.0
        %741 = vmatprep.subr.mxu0 0.0
        %742 = vmatpush1.msra.mxu0 0.0
        %743 = vmatprep.subr.mxu0 0.0
        %744 = vmatpush1.msra.mxu0 0.0
        %745 = vmatprep.subr.mxu0 0.0
        %746 = vmatpush1.msra.mxu0 0.0
        %747 = vmatprep.subr.mxu0 0.0
        %748 = vmatpush1.msra.mxu0 0.0
        %749 = vmatprep.subr.mxu0 0.0
        %750 = vmatpush1.msra.mxu0 0.0
        %751 = vmatprep.subr.mxu0 0.0
        %752 = vmatpush1.msra.mxu0 0.0
        %753 = vmatprep.subr.mxu0 0.0
        %754 = vmatpush1.msra.mxu0 0.0
        %755 = vmatprep.subr.mxu0 0.0
        %756 = vmatpush1.msra.mxu0 0.0
        %757 = vmatprep.subr.mxu0 0.0
        %758 = vmatpush1.msra.mxu0 0.0
        %759 = vmatprep.subr.mxu0 0.0
        %760 = vmatpush1.msra.mxu0 0.0
        %761 = vmatprep.subr.mxu0 0.0
        %762 = vmatpush1.msra.mxu0 0.0
        %763 = vmatprep.subr.mxu0 0.0
        %764 = vmatpush1.msra.mxu0 0.0
        %765 = vmatprep.subr.mxu0 0.0
        %766 = vmatpush1.msra.mxu0 0.0
        %767 = vmatprep.subr.mxu0 0.0
        %768 = vmatpush1.msra.mxu0 0.0
        %769 = vmatprep.subr.mxu0 0.0
        %770 = vmatpush1.msra.mxu0 0.0
        %771 = vmatprep.subr.mxu0 0.0
        %772 = vmatpush1.msra.mxu0 0.0
        %773 = vmatprep.mubr.f32.mxu0 0.0
        %774 = vmatmul.mubr.f32.gmra.mrb[0].mxu0 %v695
        %v775 = vpop.f32.mrb[0].mxu0
        %v776 = vadd.f32 0.0, %v775
        %v777 = vpop.f32.mrb[0].mxu0
        %778 = vmatprep.mubr.f32.mxu0 0.0
        %779 = vmatmul.mubr.f32.gmra.mrb[0].mxu0 %v697
        %v780 = vpop.f32.mrb[0].mxu0
        %v781 = vadd.f32 0.0, %v780
        %v782 = vpop.f32.mrb[0].mxu0
        %783 = vmatprep.mubr.f32.mxu0 0.0
        %784 = vmatmul.mubr.f32.gmra.mrb[0].mxu0 %v699
        %v785 = vpop.f32.mrb[0].mxu0
        %v786 = vadd.f32 0.0, %v785
        %v787 = vpop.f32.mrb[0].mxu0
        %788 = vmatprep.mubr.f32.mxu0 0.0
        %789 = vmatmul.mubr.f32.gmra.mrb[0].mxu0 %v701
        %v790 = vpop.f32.mrb[0].mxu0
        %v791 = vadd.f32 0.0, %v790
        %v792 = vpop.f32.mrb[0].mxu0
        %793 = vmatprep.mubr.f32.mxu0 0.0
        %794 = vmatmul.mubr.f32.gmra.mrb[0].mxu0 %v703
        %v795 = vpop.f32.mrb[0].mxu0
        %v796 = vadd.f32 0.0, %v795
        %v797 = vpop.f32.mrb[0].mxu0
        %798 = vmatprep.mubr.f32.mxu0 0.0
        %799 = vmatmul.mubr.f32.gmra.mrb[0].mxu0 %v705
        %v800 = vpop.f32.mrb[0].mxu0
        %v801 = vadd.f32 0.0, %v800
        %v802 = vpop.f32.mrb[0].mxu0
        %803 = vmatprep.mubr.f32.mxu0 0.0
        %804 = vmatmul.mubr.f32.gmra.mrb[0].mxu0 %v707
        %v805 = vpop.f32.mrb[0].mxu0
        %v806 = vadd.f32 0.0, %v805
        %v807 = vpop.f32.mrb[0].mxu0
        %808 = vdwg.mxu0
        %816 = vrot.lane.b32.xlu0 %v776, 64
        %v817 = vpop.permute.xlu0 %816
        %818 = vrot.lane.b32.xlu0 %v781, 64
        %v819 = vpop.permute.xlu0 %818
        %820 = vrot.lane.b32.xlu0 %v786, 64
        %v821 = vpop.permute.xlu0 %820
        %822 = vrot.lane.b32.xlu0 %v791, 64
        %v823 = vpop.permute.xlu0 %822
        %824 = vrot.lane.b32.xlu0 %v796, 64
        %v825 = vpop.permute.xlu0 %824
        %826 = vrot.lane.b32.xlu0 %v801, 64
        %v827 = vpop.permute.xlu0 %826
        %828 = vrot.lane.b32.xlu0 %v806, 64
        %v829 = vpop.permute.xlu0 %828
        %v837 = vadd.f32 %v567, %v817
        %v838 = vadd.f32 %v572, %v819
        %v839 = vadd.f32 %v577, %v821
        %v840 = vadd.f32 %v582, %v823
        %v841 = vadd.f32 %v587, %v825
        %v842 = vadd.f32 %v592, %v827
        %v843 = vadd.f32 %v597, %v829
        %v844 = vtanh.pop %v837
        %v845 = vtanh.pop %v838
        %v846 = vtanh.pop %v839
        %v847 = vtanh.pop %v840
        %v848 = vtanh.pop %v841
        %v849 = vtanh.pop %v842
        %v850 = vtanh.pop %v843
        %v851 = vsub.f32 1.0, %v629
        %v852 = vsub.f32 1.0, %v631
        %v853 = vsub.f32 1.0, %v633
        %v854 = vsub.f32 1.0, %v635
        %v855 = vsub.f32 1.0, %v637
        %v856 = vsub.f32 1.0, %v639
        %v857 = vsub.f32 1.0, %v641
        %v858 = vmul.f32 %v851, %v378
        %v859 = vmul.f32 %v852, %v379
        %v860 = vmul.f32 %v853, %v380
        %v861 = vmul.f32 %v854, %v381
        %v862 = vmul.f32 %v855, %v382
        %v863 = vmul.f32 %v856, %v383
        %v864 = vmul.f32 %v857, %v384
        %872 = vrot.lane.b32.xlu0 %v844, 64
        %v873 = vpop.permute.xlu0 %872
        %874 = vrot.lane.b32.xlu0 %v845, 64
        %v875 = vpop.permute.xlu0 %874
        %876 = vrot.lane.b32.xlu0 %v846, 64
        %v877 = vpop.permute.xlu0 %876
        %878 = vrot.lane.b32.xlu0 %v847, 64
        %v879 = vpop.permute.xlu0 %878
        %880 = vrot.lane.b32.xlu0 %v848, 64
        %v881 = vpop.permute.xlu0 %880
        %882 = vrot.lane.b32.xlu0 %v849, 64
        %v883 = vpop.permute.xlu0 %882
        %884 = vrot.lane.b32.xlu0 %v850, 64
        %v885 = vpop.permute.xlu0 %884
        %v893 = vmul.f32 %v629, %v873
        %v894 = vmul.f32 %v631, %v875
        %v895 = vmul.f32 %v633, %v877
        %v896 = vmul.f32 %v635, %v879
        %v897 = vmul.f32 %v637, %v881
        %v898 = vmul.f32 %v639, %v883
        %v899 = vmul.f32 %v641, %v885
        %v900 = vadd.f32 %v858, %v893
        %v901 = vadd.f32 %v859, %v894
        %v902 = vadd.f32 %v860, %v895
        %v903 = vadd.f32 %v861, %v896
        %v904 = vadd.f32 %v862, %v897
        %v905 = vadd.f32 %v863, %v898
        %v906 = vadd.f32 %v864, %v899
        %907 = vst.msk [vmem:[%s309] sm:$0xff] %vm441, %v900
        %908 = vst.msk [vmem:[%s309 + $0x8] sm:$0xff] %vm441, %v901
        %909 = vst.msk [vmem:[%s309 + $0x10] sm:$0xff] %vm441, %v902
        %910 = vst.msk [vmem:[%s309 + $0x18] sm:$0xff] %vm441, %v903
        %911 = vst.msk [vmem:[%s309 + $0x20] sm:$0xff] %vm441, %v904
        %912 = vst.msk [vmem:[%s309 + $0x28] sm:$0xff] %vm441, %v905
        %913 = vst.msk [vmem:[%s309 + $0x30] sm:$0xff] %vm441, %v906
        %s914 = sand.u32 %s166, 1
        %s915 = sand.u32 %s166, 1
        %s916 = smul.addr %s915, 56
        %s917 = scalar_lea.vmem [#allocation2], %s916
        // Predicated region
        $region45: #{tpu_custom_call.1} parent=43 // pred_check
          %p918 = pneg %p176
        $region46: #{tpu_custom_call.1} parent=43 // pred_check_branch
          %920 = sbr.rel (%p918) target = $region48
        $region47: #{tpu_custom_call.1} parent=43 // pred_region
          %s921 = smul.u32 7, %s17
          %s922 = ssub.s32 13, %s921
          %p923 = scmp.lt.s32.totalorder %s922, 7
          %s924 = scalar_select %p923, %s922, 7
          %s925 = smul.u32 128, %s924
          %p926 = scmp.ne.s32.totalorder 0, %s925
          %s927 = smul.addr %s921, 8
          %s928 = scalar_lea.vmem %s6, %s927
          // Predicated region
          $region49: #{tpu_custom_call.1} parent=47 // pred_check
            %p929 = pneg %p926
          $region50: #{tpu_custom_call.1} parent=47 // pred_check_branch
            %931 = sbr.rel (%p929) target = $region52
          $region51: #{tpu_custom_call.1} parent=47 // pred_region
            // Predicated region
            $region53: #{tpu_custom_call.1} parent=51 // pred_check
              _
            $region54: #{tpu_custom_call.1} parent=51 // pred_check_branch
              %933 = sbr.rel (0) target = $region56
            $region55: #{tpu_custom_call.1} parent=51 // pred_region
              // Predicated region
              $region75: #{tpu_custom_call.1} parent=55 // pred_check
                _
              $region76: #{tpu_custom_call.1} parent=55 // pred_check_branch
                %995 = sbr.rel (0) target = $region78
              $region77: #{tpu_custom_call.1} parent=55 // pred_region
                %s996 = sdiv.u32.pop %s924, 7
                %s997 = srem.u32.pop %s924, 7
                // While loop
                $region79: #{tpu_custom_call.1} parent=77 // loop_pre_header
                  _
                $region80: #{tpu_custom_call.1} parent=77 // loop_header
                  %s999 = sphi 0, %s1001
                  %p1000 = scmp.ge.s32.totalorder %s999, %s996
                  %s1004 = sphi 0, %s1023
                  %s1005 = sphi %s917, %s1026
                  %s1006 = sphi %s928, %s1027
                $region81: #{tpu_custom_call.1} parent=77 // loop_header_branch
                  %1003 = sbr.rel (%p1000) target = $region85
                $region82: #{tpu_custom_call.1} parent=77 // loop_body
                  %v1007 = vld [vmem:[%s1005] sm:$0xff]
                  %1008 = vst [vmem:[%s1006] sm:$0xff] %v1007
                  %v1009 = vld [vmem:[%s1005 + $0x8] sm:$0xff]
                  %1010 = vst [vmem:[%s1006 + $0x8] sm:$0xff] %v1009
                  %v1011 = vld [vmem:[%s1005 + $0x10] sm:$0xff]
                  %1012 = vst [vmem:[%s1006 + $0x10] sm:$0xff] %v1011
                  %v1013 = vld [vmem:[%s1005 + $0x18] sm:$0xff]
                  %1014 = vst [vmem:[%s1006 + $0x18] sm:$0xff] %v1013
                  %v1015 = vld [vmem:[%s1005 + $0x20] sm:$0xff]
                  %1016 = vst [vmem:[%s1006 + $0x20] sm:$0xff] %v1015
                  %v1017 = vld [vmem:[%s1005 + $0x28] sm:$0xff]
                  %1018 = vst [vmem:[%s1006 + $0x28] sm:$0xff] %v1017
                  %v1019 = vld [vmem:[%s1005 + $0x30] sm:$0xff]
                  %1020 = vst [vmem:[%s1006 + $0x30] sm:$0xff] %v1019
                  %s1021 = sadd.s32 1, %s1004
                  %p1022 = scmp.ge.s32.totalorder %s1021, %s996
                  %s1023 = scalar_select %p1022, 0, %s1021
                  %s1024 = smul.u32 %s1023, 56
                  %s1025 = smul.u32 %s1023, 56
                  %s1026 = scalar_lea.vmem %s917, %s1024 [#allocation2]
                  %s1027 = scalar_lea.vmem %s928, %s1025
                $region83: #{tpu_custom_call.1} parent=77 // loop_footer
                  %s1001 = sadd.s32 %s999, 1
                $region84: #{tpu_custom_call.1} parent=77 // loop_footer_branch
                  %998 = sbr.rel target = $region80
                $region85: #{tpu_custom_call.1} parent=77 // loop_exit
                  _
                %s1028 = sdiv.u32.pop %s924, 7
                %s1029 = srem.u32.pop %s924, 7
                %s1030 = smul.u32 %s1028, 7
                %s1031 = smul.u32 8, %s1030
                %s1032 = scalar_lea.vmem %s917, %s1031 [#allocation2]
                %s1033 = smul.u32 8, %s1030
                %s1034 = scalar_lea.vmem %s928, %s1033
                // While loop
                $region86: #{tpu_custom_call.1} parent=77 // loop_pre_header
                  _
                $region87: #{tpu_custom_call.1} parent=77 // loop_header
                  %s1036 = sphi 0, %s1038
                  %p1037 = scmp.ge.s32.totalorder %s1036, %s1029
                  %s1041 = sphi 0, %s1048
                  %s1042 = sphi %s1032, %s1051
                  %s1043 = sphi %s1034, %s1052
                $region88: #{tpu_custom_call.1} parent=77 // loop_header_branch
                  %1040 = sbr.rel (%p1037) target = $region92
                $region89: #{tpu_custom_call.1} parent=77 // loop_body
                  %v1044 = vld [vmem:[%s1042] sm:$0xff]
                  %1045 = vst [vmem:[%s1043] sm:$0xff] %v1044
                  %s1046 = sadd.s32 1, %s1041
                  %p1047 = scmp.ge.s32.totalorder %s1046, %s1029
                  %s1048 = scalar_select %p1047, 0, %s1046
                  %s1049 = smul.u32 %s1048, 8
                  %s1050 = smul.u32 %s1048, 8
                  %s1051 = scalar_lea.vmem %s1032, %s1049 [#allocation2]
                  %s1052 = scalar_lea.vmem %s1034, %s1050
                $region90: #{tpu_custom_call.1} parent=77 // loop_footer
                  %s1038 = sadd.s32 %s1036, 1
                $region91: #{tpu_custom_call.1} parent=77 // loop_footer_branch
                  %1035 = sbr.rel target = $region87
                $region92: #{tpu_custom_call.1} parent=77 // loop_exit
                  _
              $region78: #{tpu_custom_call.1} parent=55 // pred_fallthru
                _
              // Predicated region
              $region93: #{tpu_custom_call.1} parent=55 // pred_check
                _
              $region94: #{tpu_custom_call.1} parent=55 // pred_check_branch
                %1054 = sbr.rel target = $region96
              $region95: #{tpu_custom_call.1} parent=55 // pred_region
                _
              $region96: #{tpu_custom_call.1} parent=55 // pred_fallthru
                _
            $region56: #{tpu_custom_call.1} parent=51 // pred_fallthru
              _
            // Predicated region
            $region57: #{tpu_custom_call.1} parent=51 // pred_check
              _
            $region58: #{tpu_custom_call.1} parent=51 // pred_check_branch
              %935 = sbr.rel target = $region60
            $region59: #{tpu_custom_call.1} parent=51 // pred_region
              %s937 = sdiv.u32.pop %s924, 7
              %s938 = srem.u32.pop %s924, 7
              // While loop
              $region61: #{tpu_custom_call.1} parent=59 // loop_pre_header
                _
              $region62: #{tpu_custom_call.1} parent=59 // loop_header
                %s940 = sphi 0, %s942
                %p941 = scmp.ge.s32.totalorder %s940, %s937
                %s945 = sphi 0, %s964
                %s946 = sphi %s917, %s967
                %s947 = sphi %s928, %s968
              $region63: #{tpu_custom_call.1} parent=59 // loop_header_branch
                %944 = sbr.rel (%p941) target = $region67
              $region64: #{tpu_custom_call.1} parent=59 // loop_body
                %v948 = vld [vmem:[%s946] sm:$0xff]
                %949 = vst [vmem:[%s947] sm:$0xff] %v948
                %v950 = vld [vmem:[%s946 + $0x8] sm:$0xff]
                %951 = vst [vmem:[%s947 + $0x8] sm:$0xff] %v950
                %v952 = vld [vmem:[%s946 + $0x10] sm:$0xff]
                %953 = vst [vmem:[%s947 + $0x10] sm:$0xff] %v952
                %v954 = vld [vmem:[%s946 + $0x18] sm:$0xff]
                %955 = vst [vmem:[%s947 + $0x18] sm:$0xff] %v954
                %v956 = vld [vmem:[%s946 + $0x20] sm:$0xff]
                %957 = vst [vmem:[%s947 + $0x20] sm:$0xff] %v956
                %v958 = vld [vmem:[%s946 + $0x28] sm:$0xff]
                %959 = vst [vmem:[%s947 + $0x28] sm:$0xff] %v958
                %v960 = vld [vmem:[%s946 + $0x30] sm:$0xff]
                %961 = vst [vmem:[%s947 + $0x30] sm:$0xff] %v960
                %s962 = sadd.s32 1, %s945
                %p963 = scmp.ge.s32.totalorder %s962, %s937
                %s964 = scalar_select %p963, 0, %s962
                %s965 = smul.u32 %s964, 56
                %s966 = smul.u32 %s964, 56
                %s967 = scalar_lea.vmem %s917, %s965 [#allocation2]
                %s968 = scalar_lea.vmem %s928, %s966
              $region65: #{tpu_custom_call.1} parent=59 // loop_footer
                %s942 = sadd.s32 %s940, 1
              $region66: #{tpu_custom_call.1} parent=59 // loop_footer_branch
                %939 = sbr.rel target = $region62
              $region67: #{tpu_custom_call.1} parent=59 // loop_exit
                _
              %s969 = sdiv.u32.pop %s924, 7
              %s970 = srem.u32.pop %s924, 7
              %s971 = smul.u32 %s969, 7
              %s972 = smul.u32 8, %s971
              %s973 = scalar_lea.vmem %s917, %s972 [#allocation2]
              %s974 = smul.u32 8, %s971
              %s975 = scalar_lea.vmem %s928, %s974
              // While loop
              $region68: #{tpu_custom_call.1} parent=59 // loop_pre_header
                _
              $region69: #{tpu_custom_call.1} parent=59 // loop_header
                %s977 = sphi 0, %s979
                %p978 = scmp.ge.s32.totalorder %s977, %s970
                %s982 = sphi 0, %s989
                %s983 = sphi %s973, %s992
                %s984 = sphi %s975, %s993
              $region70: #{tpu_custom_call.1} parent=59 // loop_header_branch
                %981 = sbr.rel (%p978) target = $region74
              $region71: #{tpu_custom_call.1} parent=59 // loop_body
                %v985 = vld [vmem:[%s983] sm:$0xff]
                %986 = vst [vmem:[%s984] sm:$0xff] %v985
                %s987 = sadd.s32 1, %s982
                %p988 = scmp.ge.s32.totalorder %s987, %s970
                %s989 = scalar_select %p988, 0, %s987
                %s990 = smul.u32 %s989, 8
                %s991 = smul.u32 %s989, 8
                %s992 = scalar_lea.vmem %s973, %s990 [#allocation2]
                %s993 = scalar_lea.vmem %s975, %s991
              $region72: #{tpu_custom_call.1} parent=59 // loop_footer
                %s979 = sadd.s32 %s977, 1
              $region73: #{tpu_custom_call.1} parent=59 // loop_footer_branch
                %976 = sbr.rel target = $region69
              $region74: #{tpu_custom_call.1} parent=59 // loop_exit
                _
            $region60: #{tpu_custom_call.1} parent=51 // pred_fallthru
              _
          $region52: #{tpu_custom_call.1} parent=47 // pred_fallthru
            _
          %1055 = vnop
        $region48: #{tpu_custom_call.1} parent=43 // pred_fallthru
          _
      $region44: #{tpu_custom_call.1} parent=5 // pred_fallthru
        _
      %p1056 = scmp.le.s32.totalorder 2, %s12
      // Predicated region
      $region97: #{tpu_custom_call.1} parent=5 // pred_check
        %p1057 = pneg %p1056
      $region98: #{tpu_custom_call.1} parent=5 // pred_check_branch
        %1059 = sbr.rel (%p1057) target = $region100
      $region99: #{tpu_custom_call.1} parent=5 // pred_region
        %s1060 = ssub.s32 %s12, 2
        // Predicated region
        $region101: #{tpu_custom_call.1} parent=99 // pred_check
          %p1061 = pneg %p182
        $region102: #{tpu_custom_call.1} parent=99 // pred_check_branch
          %1063 = sbr.rel (%p1061) target = $region104
        $region103: #{tpu_custom_call.1} parent=99 // pred_region
          %s1064 = sand.u32 %s167, 1
          %s1065 = sand.u32 %s167, 1
          %s1066 = smul.addr %s1065, 56
          %s1067 = scalar_lea.vmem [#allocation2], %s1066
        $region104: #{tpu_custom_call.1} parent=99 // pred_fallthru
          _
      $region100: #{tpu_custom_call.1} parent=5 // pred_fallthru
        _
    $region6: #{tpu_custom_call.1} parent=1 // loop_footer
      %s16 = sadd.s32 1, %s12
    $region7: #{tpu_custom_call.1} parent=1 // loop_footer_branch
      %11 = sbr.rel target = $region3
    $region8: #{tpu_custom_call.1} parent=1 // loop_exit
      _

</llo_original>
